<compile_context>
chip_gen: v6e
topology: v6e:2x2x1
jax: 0.10.0
libtpu: 0.0.40
codegen_flags: <defaults>
</compile_context>

<pallas_src>
import functools

import jax
import jax.numpy as jnp
from jax.experimental import pallas as pl
from jax.experimental.pallas import tpu as pltpu


def _sparse_mse_kernel(x_ref, y_ref, h_ref, o_ref, acc_ref, *,
                       n_elems, penalty_factor):
    b = pl.program_id(0)
    t = pl.program_id(1)
    is_first = (b == 0) & (t == 0)
    is_last = (b == pl.num_programs(0) - 1) & (t == pl.num_programs(1) - 1)

    @pl.when(is_first)
    def _():
        acc_ref[...] = jnp.zeros_like(acc_ref)

    # --- MSE part: accumulate sum((x - y)^2), keeping the lane axis resident. ---
    d = x_ref[...].astype(jnp.float32) - y_ref[...].astype(jnp.float32)   # (ts, D)
    acc_ref[...] += jnp.sum(d * d, axis=0, keepdims=True)                 # (1, D)

    # --- Finalize: global MSE + per-batch penalty_factor * ||h - 0.5||_F. -------
    @pl.when(is_last)
    def _():
        mse = jnp.sum(acc_ref[...]) / jnp.float32(n_elems)                # scalar
        hd = h_ref[...].astype(jnp.float32) - jnp.float32(0.5)            # (B, Sh, Dh)
        pen_sq = jnp.sum(hd * hd, axis=2)                                 # (B, Sh)
        pen_sq = jnp.sum(pen_sq, axis=1, keepdims=True)                   # (B, 1)
        o_ref[...] = mse + jnp.float32(penalty_factor) * jnp.sqrt(pen_sq)


def _choose_tile_rows(seq_len, feat, itemsize):
    """Row tile for x/y: divides seq_len, is a multiple of 8 (or == seq_len), and
    keeps one input block around <= 2 MiB (safe headroom on v7x's smaller VMEM)."""
    budget_rows = max(8, (2 * 1024 * 1024) // max(1, feat * itemsize))
    if seq_len <= budget_rows:
        return seq_len
    cap = budget_rows - (budget_rows % 8)
    for cand in range(cap, 7, -8):
        if seq_len % cand == 0:
            return cand
    # No multiple-of-8 divisor under the budget; fall back to one block per batch.
    # TODO(synk): mask a ragged tail in-kernel instead of falling back.
    return seq_len


def sparse_mse_loss(x, y, h, *, penalty_factor=0.005, reduction="mean"):
    """SparseMSELoss.forward for the module's default reduction='mean'."""
    assert x.shape == y.shape, "x and y must have the same shape"
    assert x.ndim == 3 and h.ndim == 3, "expected (B, S, D) inputs and (B, Sh, Dh) hidden"
    assert h.shape[0] == x.shape[0], "batch dims must match"
    if reduction != "mean":
        # TODO(synk): reduction='none' / 'sum' branches of the original module.
        raise NotImplementedError("only reduction='mean' (the module default) is implemented")

    B, S, D = x.shape
    _, Sh, Dh = h.shape
    n_elems = x.size

    tile_s = _choose_tile_rows(S, D, jnp.dtype(x.dtype).itemsize)
    num_t = S // tile_s

    kernel = functools.partial(
        _sparse_mse_kernel, n_elems=n_elems, penalty_factor=penalty_factor)

    out = pl.pallas_call(
        kernel,
        out_shape=jax.ShapeDtypeStruct((B, 1), jnp.float32),
        grid_spec=pltpu.PrefetchScalarGridSpec(
            num_scalar_prefetch=0,
            grid=(B, num_t),
            in_specs=[
                # x / y: one (tile_s, D) slab per (batch, row-tile); batch dim squeezed.
                pl.BlockSpec((None, tile_s, D), lambda b, t: (b, t, 0)),
                pl.BlockSpec((None, tile_s, D), lambda b, t: (b, t, 0)),
                # h: whole array, fetched once and kept resident (constant block index).
                pl.BlockSpec((B, Sh, Dh), lambda b, t: (0, 0, 0)),
            ],
            # Output block is resident across the whole grid; written at the last step.
            out_specs=pl.BlockSpec((B, 1), lambda b, t: (0, 0)),
            scratch_shapes=[pltpu.VMEM((1, D), jnp.float32)],
        ),
        compiler_params=pltpu.CompilerParams(
            # The SSE accumulates across both grid axes -> both must be "arbitrary".
            dimension_semantics=("arbitrary", "arbitrary"),
        ),
    )(x, y, h)

    return out[:, 0]  # shape (B,), matches the torch module's (batch,) result


if __name__ == "__main__":
    key = jax.random.PRNGKey(0)
    kx, ky, kh = jax.random.split(key, 3)
    B, S, D = 2, 8, 32      # batch=2, seq=8, hidden=32
    Sh, Dh = 8, 16          # hidden-state shape fed to the sparsity penalty
    x = jax.random.normal(kx, (B, S, D), dtype=jnp.float32)
    y = jax.random.normal(ky, (B, S, D), dtype=jnp.float32)
    h = jax.random.uniform(kh, (B, Sh, Dh), dtype=jnp.float32)

    loss = sparse_mse_loss(x, y, h)
    jax.block_until_ready(loss)

    # Pure-JAX reference of the PyTorch forward (reduction='mean').
    mse = jnp.mean((x - y) ** 2)
    penalty = jnp.sqrt(jnp.sum((h - 0.5) ** 2, axis=(1, 2)))
    ref = mse + 0.005 * penalty

    assert loss.shape == (B,), loss.shape
    assert jnp.allclose(loss, ref, rtol=1e-5, atol=1e-6), (loss, ref)

    print("KERNEL_OK")
</pallas_src>

<mosaic_0001>
module attributes {stable_mosaic.version = 11 : i64} {
  func.func @_sparse_mse_kernel(%arg0: i32, %arg1: i32, %arg2: memref<1x8x32xf32, #tpu.memory_space<vmem>>, %arg3: memref<1x8x32xf32, #tpu.memory_space<vmem>>, %arg4: memref<2x8x16xf32, #tpu.memory_space<vmem>>, %arg5: memref<2x1xf32, #tpu.memory_space<vmem>>, %arg6: memref<1x32xf32, #tpu.memory_space<vmem>>) attributes {dimension_semantics = [#tpu.dimension_semantics<arbitrary>, #tpu.dimension_semantics<arbitrary>], iteration_bounds = array<i64: 2, 1>, scalar_prefetch = 0 : i64, scratch_operands = 1 : i64, tpu.core_type = #tpu.core_type<tc>, window_params = [{transform_indices = @transform_0, window_bounds = array<i64: 1, 8, 32>}, {transform_indices = @transform_1, window_bounds = array<i64: 1, 8, 32>}, {pipeline_mode = #tpu.pipeline_mode<synchronous>, transform_indices = @transform_2, window_bounds = array<i64: 2, 8, 16>}, {pipeline_mode = #tpu.pipeline_mode<synchronous>, transform_indices = @transform_3, window_bounds = array<i64: 2, 1>}]} {
    %c0_i32 = arith.constant 0 : i32
    %0 = arith.cmpi eq, %arg0, %c0_i32 : i32
    %c0_i32_0 = arith.constant 0 : i32
    %1 = arith.cmpi eq, %arg1, %c0_i32_0 : i32
    %2 = arith.andi %0, %1 : i1
    %c1_i32 = arith.constant 1 : i32
    %3 = arith.cmpi eq, %arg0, %c1_i32 : i32
    %c0_i32_1 = arith.constant 0 : i32
    %4 = arith.cmpi eq, %arg1, %c0_i32_1 : i32
    %5 = arith.andi %3, %4 : i1
    %6 = arith.extui %2 : i1 to i32
    %c0_i32_2 = arith.constant 0 : i32
    %7 = arith.cmpi ne, %6, %c0_i32_2 : i32
    scf.if %7 {
      %cst_13 = arith.constant 0.000000e+00 : f32
      %21 = vector.broadcast %cst_13 : f32 to vector<1x32xf32>
      %c0_14 = arith.constant 0 : index
      %c0_15 = arith.constant 0 : index
      %22 = vector.load %arg6[%c0_14, %c0_15] : memref<1x32xf32, #tpu.memory_space<vmem>>, vector<1x32xf32>
      tpu.vector_store %arg6[%c0_14, %c0_15], %21 {strides = array<i32>} : memref<1x32xf32, #tpu.memory_space<vmem>>, vector<1x32xf32>,
    } else {
    }
    %c0 = arith.constant 0 : index
    %c0_3 = arith.constant 0 : index
    %c0_4 = arith.constant 0 : index
    %8 = vector.load %arg2[%c0, %c0_3, %c0_4] : memref<1x8x32xf32, #tpu.memory_space<vmem>>, vector<1x8x32xf32>
    %9 = vector.shape_cast %8 : vector<1x8x32xf32> to vector<8x32xf32>
    %c0_5 = arith.constant 0 : index
    %c0_6 = arith.constant 0 : index
    %c0_7 = arith.constant 0 : index
    %10 = vector.load %arg3[%c0_5, %c0_6, %c0_7] : memref<1x8x32xf32, #tpu.memory_space<vmem>>, vector<1x8x32xf32>
    %11 = vector.shape_cast %10 : vector<1x8x32xf32> to vector<8x32xf32>
    %12 = arith.subf %9, %11 : vector<8x32xf32>
    %c0_8 = arith.constant 0 : index
    %c0_9 = arith.constant 0 : index
    %13 = vector.load %arg6[%c0_8, %c0_9] : memref<1x32xf32, #tpu.memory_space<vmem>>, vector<1x32xf32>
    %14 = arith.mulf %12, %12 : vector<8x32xf32>
    %cst = arith.constant dense<0.000000e+00> : vector<32xf32>
    %15 = vector.multi_reduction <add>, %14, %cst [0] : vector<8x32xf32> to vector<32xf32>
    %16 = vector.shape_cast %15 : vector<32xf32> to vector<1x32xf32>
    %17 = arith.addf %13, %16 : vector<1x32xf32>
    %c0_10 = arith.constant 0 : index
    %c0_11 = arith.constant 0 : index
    %18 = vector.load %arg6[%c0_10, %c0_11] : memref<1x32xf32, #tpu.memory_space<vmem>>, vector<1x32xf32>
    tpu.vector_store %arg6[%c0_10, %c0_11], %17 {strides = array<i32>} : memref<1x32xf32, #tpu.memory_space<vmem>>, vector<1x32xf32>,
    %19 = arith.extui %5 : i1 to i32
    %c0_i32_12 = arith.constant 0 : i32
    %20 = arith.cmpi ne, %19, %c0_i32_12 : i32
    scf.if %20 {
      %c0_13 = arith.constant 0 : index
      %c0_14 = arith.constant 0 : index
      %21 = vector.load %arg6[%c0_13, %c0_14] : memref<1x32xf32, #tpu.memory_space<vmem>>, vector<1x32xf32>
      %22 = vector.shape_cast %21 : vector<1x32xf32> to vector<1x1x32xf32>
      %cst_15 = arith.constant dense<0.000000e+00> : vector<1xf32>
      %23 = vector.multi_reduction <add>, %22, %cst_15 [1, 2] : vector<1x1x32xf32> to vector<1xf32>
      %24 = vector.shape_cast %23 : vector<1xf32> to vector<1x1x1xf32>
      %25 = vector.extract %24[0, 0, 0] : f32 from vector<1x1x1xf32>
      %cst_16 = arith.constant 5.120000e+02 : f32
      %26 = arith.divf %25, %cst_16 : f32
      %c0_17 = arith.constant 0 : index
      %c0_18 = arith.constant 0 : index
      %c0_19 = arith.constant 0 : index
      %27 = vector.load %arg4[%c0_17, %c0_18, %c0_19] : memref<2x8x16xf32, #tpu.memory_space<vmem>>, vector<2x8x16xf32>
      %cst_20 = arith.constant 5.000000e-01 : f32
      %28 = vector.broadcast %cst_20 : f32 to vector<2x8x16xf32>
      %29 = arith.subf %27, %28 : vector<2x8x16xf32>
      %30 = arith.mulf %29, %29 : vector<2x8x16xf32>
      %cst_21 = arith.constant dense<0.000000e+00> : vector<2x8xf32>
      %31 = vector.multi_reduction <add>, %30, %cst_21 [2] : vector<2x8x16xf32> to vector<2x8xf32>
      %cst_22 = arith.constant dense<0.000000e+00> : vector<2xf32>
      %32 = vector.multi_reduction <add>, %31, %cst_22 [1] : vector<2x8xf32> to vector<2xf32>
      %33 = vector.shape_cast %32 : vector<2xf32> to vector<2x1xf32>
      %34 = math.sqrt %33 : vector<2x1xf32>
      %cst_23 = arith.constant 5.000000e-03 : f32
      %35 = vector.broadcast %cst_23 : f32 to vector<2x1xf32>
      %36 = arith.mulf %35, %34 : vector<2x1xf32>
      %37 = vector.broadcast %26 : f32 to vector<2x1xf32>
      %38 = arith.addf %37, %36 : vector<2x1xf32>
      %c0_24 = arith.constant 0 : index
      %c0_25 = arith.constant 0 : index
      %39 = vector.load %arg5[%c0_24, %c0_25] : memref<2x1xf32, #tpu.memory_space<vmem>>, vector<2x1xf32>
      tpu.vector_store %arg5[%c0_24, %c0_25], %38 {strides = array<i32>} : memref<2x1xf32, #tpu.memory_space<vmem>>, vector<2x1xf32>,
    } else {
    }
    return
  }
  func.func @transform_0(%arg0: i32, %arg1: i32) -> (i32, i32, i32) {
    %c0_i32 = arith.constant 0 : i32
    %c0_i32_0 = arith.constant 0 : i32
    return %arg0, %arg1, %c0_i32 : i32, i32, i32
  }
  func.func @transform_1(%arg0: i32, %arg1: i32) -> (i32, i32, i32) {
    %c0_i32 = arith.constant 0 : i32
    %c0_i32_0 = arith.constant 0 : i32
    return %arg0, %arg1, %c0_i32 : i32, i32, i32
  }
  func.func @transform_2(%arg0: i32, %arg1: i32) -> (i32, i32, i32) {
    %c0_i32 = arith.constant 0 : i32
    %c0_i32_0 = arith.constant 0 : i32
    %c0_i32_1 = arith.constant 0 : i32
    %c0_i32_2 = arith.constant 0 : i32
    return %c0_i32, %c0_i32_0, %c0_i32_1 : i32, i32, i32
  }
  func.func @transform_3(%arg0: i32, %arg1: i32) -> (i32, i32) {
    %c0_i32 = arith.constant 0 : i32
    %c0_i32_0 = arith.constant 0 : i32
    %c0_i32_1 = arith.constant 0 : i32
    return %c0_i32, %c0_i32_0 : i32, i32
  }
}

</mosaic_0001>

<llo_original>
// kernel: tpu_custom_call.1
$region0: #{tpu_custom_call.1}
  #allocation0 [shape = 'u32[]', space=smem, size = 0x4, offset = 0x4, fixed_abs, tag = 'smem constant byte address 0x4 - core index']
  #allocation1 [shape = 'u32[144,128]{1,0:T(1,128)}', space=vmem, size = 0x12000, scoped, tag = 'internal scratch']
  #allocation2 [shape = 'f32[1,32]{1,0:T(1,128)}', space=vmem, size = 0x200, scoped, tag = 'scratch operand']
  %s0 = inlined_call_operand.hbm [shape: f32[2,8,32], index: 0, kind: input, shape index: {}]
  %s1 = inlined_call_operand.hbm [shape: f32[2,8,32], index: 1, kind: input, shape index: {}]
  %s2 = inlined_call_operand.hbm [shape: f32[2,8,16], index: 2, kind: input, shape index: {}]
  %s3 = inlined_call_operand.vmem [shape: f32[2,1], index: 3, kind: output, shape index: {}]
  %s4 = sld [smem:[#allocation0]]
  $region65: #{tpu_custom_call.1} parent=0
    _
  %s6 = ssub.s32 1, %s4
  %s7 = scalar_select 0, %s6, %s4
  $region1: #{tpu_custom_call.1} parent=0
    #allocation3 [shape = 'u8[8192]{0}', space=vmem, size = 0x2000, scoped, tag = 'input window, operand 0']
    #allocation4 [shape = 's32[2]{0}', space=sflag, size = 0x8, scoped, tag = 'scoped memory for tpu_custom_call.1']
    #allocation5 [shape = 'u8[8192]{0}', space=vmem, size = 0x2000, scoped, tag = 'input window, operand 1']
    #allocation6 [shape = 's32[2]{0}', space=sflag, size = 0x8, scoped, tag = 'scoped memory for tpu_custom_call.1']
    #allocation7 [shape = 'u8[8192]{0}', space=vmem, size = 0x2000, scoped, tag = 'input window, operand 2, single buffered']
    %8 = vsyncpa [#allocation4], 0
    %s9 = scalar_lea.sflag [#allocation4], 1
    %10 = vsyncpa %s9, 0
    %11 = vsyncpa [#allocation6], 0
    %s12 = scalar_lea.sflag [#allocation6], 1
    %13 = vsyncpa %s12, 0
    loop: start=0, step=1, limit=4
    $region2: #{tpu_custom_call.1} parent=1 // loop_pre_header
      _
    $region3: #{tpu_custom_call.1} parent=1 // loop_header
      %s15 = sphi 0, %s19
      %p16 = scmp.ge.s32.totalorder %s15, 4
      %s22 = sphi 0, %s34
      %s23 = sphi 0, %s30
      %s24 = sphi 0, %s22
      %s25 = sphi 0, %s23
      %s26 = sphi 0, %s24
      %s27 = sphi 0, %s25
      %s39 = sphi 0, %s41
      %s42 = sphi 0, %s39
      %s43 = sphi 0, %s42
      %s59 = sphi 0, %s43
      %s67 = sphi 0, %s69
      %s70 = sphi 0, %s67
      %s71 = sphi 0, %s70
      %s87 = sphi 0, %s71
      %s91 = sphi 0, %s91
      %s93 = sphi 0, %s91
      %s94 = sphi 0, %s93
      %s108 = sphi 0, %s94
      %s112 = sphi 0, %s112
      %s114 = sphi 0, %s112
      %s115 = sphi 0, %s114
      %s129 = sphi 0, %s115
    $region4: #{tpu_custom_call.1} parent=1 // loop_header_branch
      %18 = sbr.rel (%p16) target = $region8
    $region5: #{tpu_custom_call.1} parent=1 // loop_body
      %s20 = ssub.s32 %s15, 1
      %s21 = ssub.s32 %s15, 2
      %s28 = sadd.s32 1, %s23
      %p29 = scmp.ge.s32.totalorder %s28, 1
      %s30 = scalar_select %p29, 0, %s28
      %s31 = sadd.s32 1, %s22
      %s32 = scalar_select %p29, %s31, %s22
      %p33 = scmp.ge.s32.totalorder %s32, 2
      %s34 = scalar_select %p33, 0, %s32
      %s35 = ssub.s32 %s22, %s34
      %s36 = ssub.s32 %s23, %s30
      %s37 = sor.u32 %s35, %s36
      %p38 = scmp.eq.s32.totalorder %s37, 0
      %s40 = sadd.s32 %s39, 1
      %s41 = scalar_select %p38, %s39, %s40
      %p44 = pneg %p38
      %p45 = scmp.eq.s32.totalorder %s15, 1
      %p46 = por %p44, %p45
      %p47 = scmp.ne.s32.totalorder %s39, %s42
      %p48 = scmp.eq.s32.totalorder %s15, 0
      %p49 = por %p47, %p48
      %p50 = scmp.ne.s32.totalorder %s39, %s42
      %p51 = scmp.eq.s32.totalorder %s20, 1
      %p52 = por %p50, %p51
      %p53 = scmp.ne.s32.totalorder %s42, %s43
      %p54 = scmp.eq.s32.totalorder %s20, 0
      %p55 = por %p53, %p54
      %p56 = scmp.ne.s32.totalorder %s42, %s43
      %p57 = scmp.eq.s32.totalorder %s21, 1
      %p58 = por %p56, %p57
      %p60 = scmp.ne.s32.totalorder %s43, %s59
      %p61 = scmp.eq.s32.totalorder %s21, 0
      %p62 = por %p60, %p61
      %s63 = ssub.s32 %s22, %s34
      %s64 = ssub.s32 %s23, %s30
      %s65 = sor.u32 %s63, %s64
      %p66 = scmp.eq.s32.totalorder %s65, 0
      %s68 = sadd.s32 %s67, 1
      %s69 = scalar_select %p66, %s67, %s68
      %p72 = pneg %p66
      %p73 = scmp.eq.s32.totalorder %s15, 1
      %p74 = por %p72, %p73
      %p75 = scmp.ne.s32.totalorder %s67, %s70
      %p76 = scmp.eq.s32.totalorder %s15, 0
      %p77 = por %p75, %p76
      %p78 = scmp.ne.s32.totalorder %s67, %s70
      %p79 = scmp.eq.s32.totalorder %s20, 1
      %p80 = por %p78, %p79
      %p81 = scmp.ne.s32.totalorder %s70, %s71
      %p82 = scmp.eq.s32.totalorder %s20, 0
      %p83 = por %p81, %p82
      %p84 = scmp.ne.s32.totalorder %s70, %s71
      %p85 = scmp.eq.s32.totalorder %s21, 1
      %p86 = por %p84, %p85
      %p88 = scmp.ne.s32.totalorder %s71, %s87
      %p89 = scmp.eq.s32.totalorder %s21, 0
      %p90 = por %p88, %p89
      %s92 = sadd.s32 %s91, 1
      %p95 = scmp.eq.s32.totalorder %s15, 1
      %p96 = scmp.ne.s32.totalorder %s91, %s93
      %p97 = scmp.eq.s32.totalorder %s15, 0
      %p98 = por %p96, %p97
      %p99 = scmp.ne.s32.totalorder %s91, %s93
      %p100 = scmp.eq.s32.totalorder %s20, 1
      %p101 = por %p99, %p100
      %p102 = scmp.ne.s32.totalorder %s93, %s94
      %p103 = scmp.eq.s32.totalorder %s20, 0
      %p104 = por %p102, %p103
      %p105 = scmp.ne.s32.totalorder %s93, %s94
      %p106 = scmp.eq.s32.totalorder %s21, 1
      %p107 = por %p105, %p106
      %p109 = scmp.ne.s32.totalorder %s94, %s108
      %p110 = scmp.eq.s32.totalorder %s21, 0
      %p111 = por %p109, %p110
      %s113 = sadd.s32 %s112, 1
      %p116 = scmp.eq.s32.totalorder %s15, 1
      %p117 = scmp.ne.s32.totalorder %s112, %s114
      %p118 = scmp.eq.s32.totalorder %s15, 0
      %p119 = por %p117, %p118
      %p120 = scmp.ne.s32.totalorder %s112, %s114
      %p121 = scmp.eq.s32.totalorder %s20, 1
      %p122 = por %p120, %p121
      %p123 = scmp.ne.s32.totalorder %s114, %s115
      %p124 = scmp.eq.s32.totalorder %s20, 0
      %p125 = por %p123, %p124
      %p126 = scmp.ne.s32.totalorder %s114, %s115
      %p127 = scmp.eq.s32.totalorder %s21, 1
      %p128 = por %p126, %p127
      %p130 = scmp.ne.s32.totalorder %s115, %s129
      %p131 = scmp.eq.s32.totalorder %s21, 0
      %p132 = por %p130, %p131
      %p133 = scmp.le.s32.totalorder 1, %s15
      %p134 = scmp.lt.s32.totalorder %s15, 3
      %p135 = pnand %p133, %p134
      %p136 = pneg %p135
      // Predicated region
      $region9: #{tpu_custom_call.1} parent=5 // pred_check
        _
      $region10: #{tpu_custom_call.1} parent=5 // pred_check_branch
        %138 = sbr.rel (%p135) target = $region12
      $region11: #{tpu_custom_call.1} parent=5 // pred_region
        %s139 = ssub.s32 %s15, 1
        // Predicated region
        $region13: #{tpu_custom_call.1} parent=11 // pred_check
          %p140 = pneg %p104
        $region14: #{tpu_custom_call.1} parent=11 // pred_check_branch
          %142 = sbr.rel (%p140) target = $region16
        $region15: #{tpu_custom_call.1} parent=11 // pred_region
          %s144 = ssub.s32 256, 256
          %145 = vsyncadd [#allocation6], %s144
          %s146 = sshll.u32 [#allocation7], 4
          %s147 = int_to_ptr.vmem [resolvable:$true] %s146
          %152 = dma.hbm_to_vmem [thread:$0]  %s2, 256, %s147, [#allocation6], 128, 128, 8
        $region16: #{tpu_custom_call.1} parent=11 // pred_fallthru
          _
      $region12: #{tpu_custom_call.1} parent=5 // pred_fallthru
        _
      %p153 = scmp.lt.s32.totalorder %s15, 2
      // Predicated region
      $region17: #{tpu_custom_call.1} parent=5 // pred_check
        %p154 = pneg %p153
      $region18: #{tpu_custom_call.1} parent=5 // pred_check_branch
        %156 = sbr.rel (%p154) target = $region20
      $region19: #{tpu_custom_call.1} parent=5 // pred_region
        // Predicated region
        $region21: #{tpu_custom_call.1} parent=19 // pred_check
          %p157 = pneg %p49
        $region22: #{tpu_custom_call.1} parent=19 // pred_check_branch
          %159 = sbr.rel (%p157) target = $region24
        $region23: #{tpu_custom_call.1} parent=19 // pred_region
          %s160 = sand.u32 %s39, 1
          %s161 = scalar_lea.sflag [#allocation4], %s160
          %s162 = sand.u32 %s39, 1
          %s163 = smul.addr %s162, 8
          %s164 = scalar_lea.vmem [#allocation3], %s163
          %s166 = ssub.s32 128, 128
          %167 = vsyncadd %s161, %s166
          %s168 = sadd.s32 %s23, %s22
          %s169 = smul.addr %s168, 128
          %s170 = scalar_lea.hbm %s0, %s169
          %s172 = sshll.u32 %s164, 4
          %s173 = int_to_ptr.vmem [resolvable:$true] %s172
          %175 = dma.hbm_to_vmem [thread:$0]  %s170, 128, %s173, %s161
        $region24: #{tpu_custom_call.1} parent=19 // pred_fallthru
          _
        // Predicated region
        $region25: #{tpu_custom_call.1} parent=19 // pred_check
          %p176 = pneg %p77
        $region26: #{tpu_custom_call.1} parent=19 // pred_check_branch
          %178 = sbr.rel (%p176) target = $region28
        $region27: #{tpu_custom_call.1} parent=19 // pred_region
          %s179 = sand.u32 %s15, 1
          %s180 = scalar_lea.sflag [#allocation6], %s179
          %s181 = sand.u32 %s67, 1
          %s182 = smul.addr %s181, 8
          %s183 = scalar_lea.vmem [#allocation5], %s182
          %s185 = ssub.s32 128, 128
          %186 = vsyncadd %s180, %s185
          %s187 = sadd.s32 %s23, %s22
          %s188 = smul.addr %s187, 128
          %s189 = scalar_lea.hbm %s1, %s188
          %s191 = sshll.u32 %s183, 4
          %s192 = int_to_ptr.vmem [resolvable:$true] %s191
          %194 = dma.hbm_to_vmem [thread:$0]  %s189, 128, %s192, %s180
        $region28: #{tpu_custom_call.1} parent=19 // pred_fallthru
          _
      $region20: #{tpu_custom_call.1} parent=5 // pred_fallthru
        _
      %p195 = scmp.le.s32.totalorder 1, %s15
      %p196 = scmp.lt.s32.totalorder %s15, 3
      %p197 = pnand %p195, %p196
      %p198 = pneg %p197
      // Predicated region
      $region29: #{tpu_custom_call.1} parent=5 // pred_check
        _
      $region30: #{tpu_custom_call.1} parent=5 // pred_check_branch
        %200 = sbr.rel (%p197) target = $region32
      $region31: #{tpu_custom_call.1} parent=5 // pred_region
        %s201 = ssub.s32 %s15, 1
        %s202 = sand.u32 %s42, 1
        %s203 = scalar_lea.sflag [#allocation4], %s202
        %s204 = sand.u32 %s42, 1
        %s205 = smul.addr %s204, 8
        %s206 = scalar_lea.vmem [#allocation3], %s205
        // Predicated region
        $region33: #{tpu_custom_call.1} parent=31 // pred_check
          %p207 = pneg %p55
        $region34: #{tpu_custom_call.1} parent=31 // pred_check_branch
          %209 = sbr.rel (%p207) target = $region36
        $region35: #{tpu_custom_call.1} parent=31 // pred_region
          %210 = dma.done %s203, 128
        $region36: #{tpu_custom_call.1} parent=31 // pred_fallthru
          _
        %s211 = sand.u32 %s20, 1
        %s212 = scalar_lea.sflag [#allocation6], %s211
        %s213 = sand.u32 %s70, 1
        %s214 = smul.addr %s213, 8
        %s215 = scalar_lea.vmem [#allocation5], %s214
        // Predicated region
        $region37: #{tpu_custom_call.1} parent=31 // pred_check
          %p216 = pneg %p83
        $region38: #{tpu_custom_call.1} parent=31 // pred_check_branch
          %218 = sbr.rel (%p216) target = $region40
        $region39: #{tpu_custom_call.1} parent=31 // pred_region
          %219 = dma.done %s212, 128
        $region40: #{tpu_custom_call.1} parent=31 // pred_fallthru
          _
        // Predicated region
        $region41: #{tpu_custom_call.1} parent=31 // pred_check
          %p220 = pneg %p104
        $region42: #{tpu_custom_call.1} parent=31 // pred_check_branch
          %222 = sbr.rel (%p220) target = $region44
        $region43: #{tpu_custom_call.1} parent=31 // pred_region
          %223 = dma.done [#allocation6], 256
        $region44: #{tpu_custom_call.1} parent=31 // pred_fallthru
          _
        %s224 = sand.u32 %s42, 1
        %s225 = scalar_lea.sflag [#allocation4], %s224
        %s226 = sand.u32 %s42, 1
        %s227 = smul.addr %s226, 8
        %s228 = scalar_lea.vmem [#allocation3], %s227
        %p229 = pneg %p55
        %p230 = pneg %p52
        %s231 = sand.u32 %s20, 1
        %s232 = scalar_lea.sflag [#allocation6], %s231
        %s233 = sand.u32 %s70, 1
        %s234 = smul.addr %s233, 8
        %s235 = scalar_lea.vmem [#allocation5], %s234
        %p236 = pneg %p83
        %p237 = pneg %p80
        %p238 = pneg %p104
        %p239 = pneg %p101
        %p240 = pneg %p125
        %p241 = pneg %p122
        %p242 = scmp.eq.s32.totalorder %s24, 0
        %p243 = scmp.eq.s32.totalorder %s25, 0
        %p244 = pnand %p242, %p243
        %p245 = pneg %p244
        %p246 = scmp.eq.s32.totalorder %s24, 1
        %p247 = pnand %p246, %p243
        %p248 = pneg %p247
        // Predicated region
        $region45: #{tpu_custom_call.1} parent=31 // pred_check
          _
        $region46: #{tpu_custom_call.1} parent=31 // pred_check_branch
          %250 = sbr.rel (%p244) target = $region48
        $region47: #{tpu_custom_call.1} parent=31 // pred_region
          %vm251 = vcmask 253952
          %252 = vst.msk [vmem:[#allocation2] sm:$0x1] %vm251, 0.0
        $region48: #{tpu_custom_call.1} parent=31 // pred_fallthru
          _
        %v253 = vld [vmem:[%s206] sm:$0xff]
        %v254 = vld [vmem:[%s215] sm:$0xff]
        %v255 = vsub.f32 %v253, %v254
        %v256 = vld [vmem:[#allocation2] sm:$0x1]
        %v257 = vmul.f32 %v255, %v255
        %vm258 = vcmask 261120
        %v259 = vsel %vm258, %v257, 0.0
        %v260 = vrot.slane %v259, 4
        %v261 = vadd.f32 %v259, %v260
        %v262 = vrot.slane %v261, 2
        %v263 = vadd.f32 %v261, %v262
        %v264 = vrot.slane %v263, 1
        %v265 = vadd.f32 %v263, %v264
        %v266 = vadd.f32 %v256, %v265
        %vm267 = vcmask 253952
        %268 = vst.msk [vmem:[#allocation2] sm:$0x1] %vm267, %v266
        // Predicated region
        $region49: #{tpu_custom_call.1} parent=31 // pred_check
          _
        $region50: #{tpu_custom_call.1} parent=31 // pred_check_branch
          %270 = sbr.rel (%p247) target = $region52
        $region51: #{tpu_custom_call.1} parent=31 // pred_region
          %v271 = vld [vmem:[#allocation2] sm:$0x1]
          %v272 = vsel %vm267, %v271, 0.0
          %273 = vadd.xlane.f32.xlu0 %v272
          %v274 = vpop.xlane.xlu0 %273
          %v275 = vrot.slane %v274, 4
          %v276 = vadd.f32 %v274, %v275
          %v277 = vrot.slane %v276, 2
          %v278 = vadd.f32 %v276, %v277
          %v279 = vrot.slane %v278, 1
          %v280 = vadd.f32 %v278, %v279
          %s281 = vtos %v280
          %v282 = vrcp.pop 512.0
          %s283 = vtos %v282
          %s284 = smul.f32 %s281, %s283
          %v285 = vld [vmem:[#allocation7] sm:$0xff]
          %v286 = vld [vmem:[#allocation7 + $0x8] sm:$0xff]
          %v287 = vsub.f32 %v285, 0.5
          %v288 = vsub.f32 %v286, 0.5
          %v289 = vmul.f32 %v287, %v287
          %v290 = vmul.f32 %v288, %v288
          %vm291 = vcmask 130048
          %v292 = vsel %vm291, %v289, 0.0
          %293 = vadd.xlane.f32.xlu0 %v292
          %v294 = vpop.xlane.xlu0 %293
          %v295 = vsel %vm291, %v290, 0.0
          %296 = vadd.xlane.f32.xlu0 %v295
          %v297 = vpop.xlane.xlu0 %296
          %v300 = vlaneseq
          %v301 = vand.u32 %v300, 127
          %v302 = vlaneseq
          %v303 = vshrl.u32 %v302, 7
          %v304 = vsub.s32 %v301, %v303
          %v305 = vrot.slane %v294, %v304
          %v306 = vlaneseq
          %v307 = vshrl.u32 %v306, 7
          %v308 = vsub.s32 %v301, %v307
          %v309 = vrot.slane %v297, %v308
          %vm310 = vcmask 1041409
          %v311 = vsel %vm310, %v309, %v305
          %vm313 = vcmask 58368
          %v314 = vsel %vm313, %v311, 0.0
          %315 = vadd.xlane.f32.xlu0 %v314
          %v316 = vpop.xlane.xlu0 %315
          %v317 = vrsqrt.pop %v316
          %v318 = vmul.f32 %v316, %v317
          %vm319 = vcmp.eq.f32.partialorder %v316, inf
          %v320 = vsel %vm319, %v316, %v318
          %vm321 = vcmp.eq.f32.partialorder %v316, 0.0
          %v322 = vand.u32 %v316, 2147483648
          %v323 = vsel %vm321, %v322, %v320
          %v324 = vmul.f32 %v323, 0.005
          %v325 = vstv %s284
          %v326 = vadd.f32 %v325, %v324
          %vm327 = vcmask 1024
          %328 = vst.msk [vmem:[%s3] sm:$0x3] %vm327, %v326
        $region52: #{tpu_custom_call.1} parent=31 // pred_fallthru
          _
        // Predicated region
        $region53: #{tpu_custom_call.1} parent=31 // pred_check
          %p329 = pneg %p122
        $region54: #{tpu_custom_call.1} parent=31 // pred_check_branch
          %331 = sbr.rel (%p329) target = $region56
        $region55: #{tpu_custom_call.1} parent=31 // pred_region
          _
        $region56: #{tpu_custom_call.1} parent=31 // pred_fallthru
          _
        // Predicated region
        $region57: #{tpu_custom_call.1} parent=31 // pred_check
          %p332 = pneg %p122
        $region58: #{tpu_custom_call.1} parent=31 // pred_check_branch
          %334 = sbr.rel (%p332) target = $region60
        $region59: #{tpu_custom_call.1} parent=31 // pred_region
          _
        $region60: #{tpu_custom_call.1} parent=31 // pred_fallthru
          _
      $region32: #{tpu_custom_call.1} parent=5 // pred_fallthru
        _
      %p335 = scmp.le.s32.totalorder 2, %s15
      // Predicated region
      $region61: #{tpu_custom_call.1} parent=5 // pred_check
        %p336 = pneg %p335
      $region62: #{tpu_custom_call.1} parent=5 // pred_check_branch
        %338 = sbr.rel (%p336) target = $region64
      $region63: #{tpu_custom_call.1} parent=5 // pred_region
        %s339 = ssub.s32 %s15, 2
      $region64: #{tpu_custom_call.1} parent=5 // pred_fallthru
        _
    $region6: #{tpu_custom_call.1} parent=1 // loop_footer
      %s19 = sadd.s32 1, %s15
    $region7: #{tpu_custom_call.1} parent=1 // loop_footer_branch
      %14 = sbr.rel target = $region3
    $region8: #{tpu_custom_call.1} parent=1 // loop_exit
      _
    %340 = vsyncpa [#allocation4], 1
    %s341 = scalar_lea.sflag [#allocation4], 1
    %342 = vsyncpa %s341, 1
    %343 = vsyncpa [#allocation6], 1
    %s344 = scalar_lea.sflag [#allocation6], 1
    %345 = vsyncpa %s344, 1

</llo_original>
